<compile_context>
chip_gen: v7x
topology: tpu7x:2x2x1
jax: 0.10.0
libtpu: 0.0.40
codegen_flags: <defaults>
</compile_context>

<pallas_src>
import jax
import jax.numpy as jnp
from jax.experimental import pallas as pl
from jax.experimental.pallas import tpu as pltpu


def _round_up(x, m):
    return (x + m - 1) // m * m


# ---------------------------------------------------------------------------
# Kernel: one (batch, query-tile) step.
# ---------------------------------------------------------------------------
def _selfalign_kernel(h_ref, x1_ref, maskb_ref, maskq_ref, bias_ref,
                      out_ref, attn_ref):
    h = h_ref[0]              # (TQ, Dp)  bf16   query slab (already text @ W^T)
    x1 = x1_ref[0]            # (Np, Dp)  bf16   keys / values (VMEM-resident)
    mask_b = maskb_ref[0]     # (1, Np)   f32    additive key mask (precomputed)
    mask_q = maskq_ref[0]     # (TQ, 1)   f32    multiplicative query-row mask
    bias = bias_ref[...]      # (1, Dp)   f32

    # logits = h @ x1^T   (bf16 operands on the MXU, f32 accumulation)
    logits = jax.lax.dot_general(h, x1, (((1,), (1,)), ((), ())),
                                 preferred_element_type=jnp.float32)
    logits = logits + mask_b

    # softmax over keys in f32; denominator reciprocal goes to the EUP slot.
    m = jnp.max(logits, axis=-1, keepdims=True)
    e = jnp.exp(logits - m)
    denom = jnp.sum(e, axis=-1, keepdims=True)
    probs = e * pl.reciprocal(denom, approx=True)

    # output = probs @ x1   (probs cast to bf16 at the MXU, f32 accumulation)
    out = jnp.dot(probs.astype(jnp.bfloat16), x1,
                  preferred_element_type=jnp.float32)

    out_ref[0] = (out * mask_q + bias).astype(out_ref.dtype)
    attn_ref[0] = (probs * mask_q).astype(attn_ref.dtype)


# ---------------------------------------------------------------------------
# VMEM budget (sized against v7x's 64 MiB physical; trivial slack on v5e/v6e).
# ---------------------------------------------------------------------------
_VMEM_BUDGET_BYTES = 36 * 1024 * 1024
_VMEM_LIMIT_BYTES = 48 * 1024 * 1024


def _vmem_bytes(tq, np_, dp):
    resident = 2 * np_ * dp * 2                 # text1 block (bf16, dbl-buffered)
    streamed = 2 * (tq * dp * 2                 # h slab (bf16)
                    + 8 * np_ * 4               # (1, Np) additive key mask
                    + tq * 128 * 4              # (TQ, 1) query mask (lane-padded)
                    + 8 * dp * 4                # (1, Dp) bias
                    + tq * dp * 4               # (TQ, Dp) output
                    + tq * np_ * 4)             # (TQ, Np) attn output
    live = 2 * tq * np_ * 4                     # f32 logits / probs live values
    return resident + streamed + live


def _pick_tq(np_, dp):
    for tq in (512, 384, 256, 128):
        if np_ % tq == 0 and _vmem_bytes(tq, np_, dp) <= _VMEM_BUDGET_BYTES:
            return tq
    return 128


# ---------------------------------------------------------------------------
# Wrapper
# ---------------------------------------------------------------------------
def selfalignment_forward(text, text1, textmask, weight, bias):
    """text, text1: (B, N, D); textmask: (B, N); weight: (D, D) in PyTorch
    nn.Linear layout (out, in); bias: (D,). Returns (output, masked_probs)."""
    B, N, D = text.shape
    Np = _round_up(N, 128)
    Dp = _round_up(D, 128)

    # bf16 operands for the MXU; accumulation stays f32 inside the kernel.
    t_bf = text.astype(jnp.bfloat16)
    t1_bf = text1.astype(jnp.bfloat16)
    w_bf = weight.astype(jnp.bfloat16)

    # Hoist the shared linear into a single big-M matmul (B*N, D) x (D, D).
    h = jax.lax.dot_general(t_bf.reshape(B * N, D), w_bf,
                            (((1,), (1,)), ((), ())),
                            preferred_element_type=jnp.float32)
    h = h.astype(jnp.bfloat16).reshape(B, N, D)

    # Pad to lane-dense multiples of 128; padded keys get mask 0 -> -1e20 bias.
    h_p = jnp.pad(h, ((0, 0), (0, Np - N), (0, Dp - D)))
    x1_p = jnp.pad(t1_bf, ((0, 0), (0, Np - N), (0, Dp - D)))

    maskf = jnp.pad(textmask.astype(jnp.float32), ((0, 0), (0, Np - N)))
    mask_bias = ((maskf - 1.0) * 1e20).reshape(B, 1, Np)   # additive key mask
    mask_q = maskf.reshape(B, Np, 1)                       # query-row mask
    bias_p = jnp.pad(bias.astype(jnp.float32), (0, Dp - D)).reshape(1, Dp)

    TQ = _pick_tq(Np, Dp)
    grid = (B, Np // TQ)

    out_shapes = (
        jax.ShapeDtypeStruct((B, Np, Dp), jnp.float32),   # output
        jax.ShapeDtypeStruct((B, Np, Np), jnp.float32),   # masked attention
    )

    out_p, attn_p = pl.pallas_call(
        _selfalign_kernel,
        out_shape=out_shapes,
        grid=grid,
        in_specs=[
            pl.BlockSpec((1, TQ, Dp), lambda b, q: (b, q, 0)),   # h (query slab)
            pl.BlockSpec((1, Np, Dp), lambda b, q: (b, 0, 0)),   # text1 (resident over q)
            pl.BlockSpec((1, 1, Np), lambda b, q: (b, 0, 0)),    # additive key mask
            pl.BlockSpec((1, TQ, 1), lambda b, q: (b, q, 0)),    # query-row mask
            pl.BlockSpec((1, Dp), lambda b, q: (0, 0)),          # bias
        ],
        out_specs=(
            pl.BlockSpec((1, TQ, Dp), lambda b, q: (b, q, 0)),
            # NOTE: if the (TQ, Np) attn writeback DMA ever shows as exposed,
            # add pipeline_mode=pl.Buffered(3) here (re-check budget on v7x).
            pl.BlockSpec((1, TQ, Np), lambda b, q: (b, q, 0)),
        ),
        compiler_params=pltpu.CompilerParams(
            dimension_semantics=("parallel", "parallel"),
            vmem_limit_bytes=_VMEM_LIMIT_BYTES),
    )(h_p, x1_p, mask_bias, mask_q, bias_p)

    return out_p[:, :N, :D], attn_p[:, :N, :N]


# ---------------------------------------------------------------------------
# References
# ---------------------------------------------------------------------------
def _reference_f32(text, text1, textmask, weight, bias):
    h = jnp.einsum("bnd,ed->bne", text, weight)
    logits = jnp.einsum("bne,bme->bnm", h, text1)
    masked = (1.0 - textmask[:, None, :]) * -1e20
    probs = jax.nn.softmax(logits + masked, axis=-1)
    output = jnp.einsum("bnm,bmd->bnd", probs, text1)
    output = output * textmask[:, :, None]
    return output + bias, probs * textmask[:, :, None]


def _reference_bf16(text, text1, textmask, weight, bias):
    # Mirrors the kernel's mixed-precision policy (bf16 matmul operands, f32
    # accumulation / softmax) so the kernel logic can be checked tightly.
    t = text.astype(jnp.bfloat16)
    t1 = text1.astype(jnp.bfloat16)
    w = weight.astype(jnp.bfloat16)
    h = jnp.einsum("bnd,ed->bne", t, w,
                   preferred_element_type=jnp.float32).astype(jnp.bfloat16)
    logits = jnp.einsum("bne,bme->bnm", h, t1,
                        preferred_element_type=jnp.float32)
    masked = (1.0 - textmask[:, None, :]) * -1e20
    probs = jax.nn.softmax(logits + masked, axis=-1)
    output = jnp.einsum("bnm,bmd->bnd", probs.astype(jnp.bfloat16), t1,
                        preferred_element_type=jnp.float32)
    output = output * textmask[:, :, None]
    return output + bias, probs * textmask[:, :, None]


if __name__ == "__main__":
    B, N, D = 2, 16, 32
    key = jax.random.PRNGKey(0)
    k1, k2, k3, k4 = jax.random.split(key, 4)

    text = jax.random.normal(k1, (B, N, D), dtype=jnp.float32)
    text1 = jax.random.normal(k2, (B, N, D), dtype=jnp.float32)
    # mask: first batch fully valid, second batch has a padded tail
    textmask = jnp.concatenate(
        [jnp.ones((1, N), jnp.float32),
         jnp.concatenate([jnp.ones((1, N - 4), jnp.float32),
                          jnp.zeros((1, 4), jnp.float32)], axis=1)], axis=0)

    # Deterministic parameter init (nn.Linear weight (D, D), bias (D,))
    weight = jax.random.normal(k3, (D, D), dtype=jnp.float32) * (1.0 / jnp.sqrt(D))
    bias = jax.random.normal(k4, (D,), dtype=jnp.float32) * 0.1

    out, attn = selfalignment_forward(text, text1, textmask, weight, bias)
    jax.block_until_ready(out)
    jax.block_until_ready(attn)

    # Tight check of kernel logic vs a matched-precision (bf16-operand) reference.
    ref_out_mp, ref_attn_mp = _reference_bf16(text, text1, textmask, weight, bias)
    assert jnp.allclose(out, ref_out_mp, atol=2e-2, rtol=2e-2)
    assert jnp.allclose(attn, ref_attn_mp, atol=2e-2, rtol=2e-2)

    # Fidelity to the full-f32 module math (bf16 MXU operands => looser tol).
    ref_out, ref_attn = _reference_f32(text, text1, textmask, weight, bias)
    assert jnp.allclose(out, ref_out, atol=1e-1, rtol=1e-1)
    assert jnp.allclose(attn, ref_attn, atol=1e-1, rtol=1e-1)

    print("KERNEL_OK")
</pallas_src>

<mosaic_0001>
module attributes {stable_mosaic.version = 11 : i64} {
  func.func @_selfalign_kernel(%arg0: i32, %arg1: i32, %arg2: memref<1x128x128xbf16, #tpu.memory_space<vmem>>, %arg3: memref<1x128x128xbf16, #tpu.memory_space<vmem>>, %arg4: memref<1x1x128xf32, #tpu.memory_space<vmem>>, %arg5: memref<1x128x1xf32, #tpu.memory_space<vmem>>, %arg6: memref<1x128xf32, #tpu.memory_space<vmem>>, %arg7: memref<1x128x128xf32, #tpu.memory_space<vmem>>, %arg8: memref<1x128x128xf32, #tpu.memory_space<vmem>>) attributes {dimension_semantics = [#tpu.dimension_semantics<parallel>, #tpu.dimension_semantics<parallel>], iteration_bounds = array<i64: 2, 1>, scalar_prefetch = 0 : i64, scratch_operands = 0 : i64, tpu.core_type = #tpu.core_type<tc>, window_params = [{transform_indices = @transform_0, window_bounds = array<i64: 1, 128, 128>}, {transform_indices = @transform_1, window_bounds = array<i64: 1, 128, 128>}, {transform_indices = @transform_2, window_bounds = array<i64: 1, 1, 128>}, {transform_indices = @transform_3, window_bounds = array<i64: 1, 128, 1>}, {pipeline_mode = #tpu.pipeline_mode<synchronous>, transform_indices = @transform_4, window_bounds = array<i64: 1, 128>}, {transform_indices = @transform_5, window_bounds = array<i64: 1, 128, 128>}, {transform_indices = @transform_6, window_bounds = array<i64: 1, 128, 128>}]} {
    %c0 = arith.constant 0 : index
    %c0_0 = arith.constant 0 : index
    %c0_1 = arith.constant 0 : index
    %0 = vector.load %arg2[%c0, %c0_0, %c0_1] : memref<1x128x128xbf16, #tpu.memory_space<vmem>>, vector<1x128x128xbf16>
    %1 = vector.shape_cast %0 : vector<1x128x128xbf16> to vector<128x128xbf16>
    %c0_2 = arith.constant 0 : index
    %c0_3 = arith.constant 0 : index
    %c0_4 = arith.constant 0 : index
    %2 = vector.load %arg3[%c0_2, %c0_3, %c0_4] : memref<1x128x128xbf16, #tpu.memory_space<vmem>>, vector<1x128x128xbf16>
    %3 = vector.shape_cast %2 : vector<1x128x128xbf16> to vector<128x128xbf16>
    %c0_5 = arith.constant 0 : index
    %c0_6 = arith.constant 0 : index
    %c0_7 = arith.constant 0 : index
    %4 = vector.load %arg4[%c0_5, %c0_6, %c0_7] : memref<1x1x128xf32, #tpu.memory_space<vmem>>, vector<1x1x128xf32>
    %5 = vector.shape_cast %4 : vector<1x1x128xf32> to vector<1x128xf32>
    %c0_8 = arith.constant 0 : index
    %c0_9 = arith.constant 0 : index
    %c0_10 = arith.constant 0 : index
    %6 = vector.load %arg5[%c0_8, %c0_9, %c0_10] : memref<1x128x1xf32, #tpu.memory_space<vmem>>, vector<1x128x1xf32>
    %7 = vector.shape_cast %6 : vector<1x128x1xf32> to vector<128x1xf32>
    %c0_11 = arith.constant 0 : index
    %c0_12 = arith.constant 0 : index
    %8 = vector.load %arg6[%c0_11, %c0_12] : memref<1x128xf32, #tpu.memory_space<vmem>>, vector<1x128xf32>
    %cst = arith.constant dense<0.000000e+00> : vector<128x128xf32>
    %9 = tpu.matmul %1, %3, %cst {dimension_numbers = #tpu.dot_dimension_numbers<[1], [1], [0], [0], [0, 0, 1, 0], [], []>} : vector<128x128xbf16>, vector<128x128xbf16>, vector<128x128xf32> -> vector<128x128xf32>
    %10 = vector.broadcast %5 : vector<1x128xf32> to vector<128x128xf32>
    %11 = arith.addf %9, %10 : vector<128x128xf32>
    %cst_13 = arith.constant dense<0xFF800000> : vector<128xf32>
    %12 = vector.multi_reduction <maximumf>, %11, %cst_13 [1] : vector<128x128xf32> to vector<128xf32>
    %13 = vector.shape_cast %12 : vector<128xf32> to vector<128x1xf32>
    %14 = vector.broadcast %13 : vector<128x1xf32> to vector<128x128xf32>
    %15 = arith.subf %11, %14 : vector<128x128xf32>
    %16 = math.exp %15 : vector<128x128xf32>
    %cst_14 = arith.constant dense<0.000000e+00> : vector<128xf32>
    %17 = vector.multi_reduction <add>, %16, %cst_14 [1] : vector<128x128xf32> to vector<128xf32>
    %18 = vector.shape_cast %17 : vector<128xf32> to vector<128x1xf32>
    %19 = tpu.reciprocal %18 {approx = true} : vector<128x1xf32> -> vector<128x1xf32>
    %20 = vector.broadcast %19 : vector<128x1xf32> to vector<128x128xf32>
    %21 = arith.mulf %16, %20 : vector<128x128xf32>
    %22 = arith.truncf %21 : vector<128x128xf32> to vector<128x128xbf16>
    %cst_15 = arith.constant dense<0.000000e+00> : vector<128x128xf32>
    %23 = tpu.matmul %22, %3, %cst_15 {dimension_numbers = #tpu.dot_dimension_numbers<[1], [0], [0], [1], [0, 0, 1, 1], [], []>} : vector<128x128xbf16>, vector<128x128xbf16>, vector<128x128xf32> -> vector<128x128xf32>
    %24 = vector.broadcast %7 : vector<128x1xf32> to vector<128x128xf32>
    %25 = arith.mulf %23, %24 : vector<128x128xf32>
    %26 = vector.broadcast %8 : vector<1x128xf32> to vector<128x128xf32>
    %27 = arith.addf %25, %26 : vector<128x128xf32>
    %c0_16 = arith.constant 0 : index
    %c0_17 = arith.constant 0 : index
    %c0_18 = arith.constant 0 : index
    %28 = vector.load %arg7[%c0_16, %c0_17, %c0_18] : memref<1x128x128xf32, #tpu.memory_space<vmem>>, vector<1x128x128xf32>
    %29 = vector.shape_cast %28 : vector<1x128x128xf32> to vector<128x128xf32>
    %30 = vector.shape_cast %27 : vector<128x128xf32> to vector<1x128x128xf32>
    tpu.vector_store %arg7[%c0_16, %c0_17, %c0_18], %30 {strides = array<i32>} : memref<1x128x128xf32, #tpu.memory_space<vmem>>, vector<1x128x128xf32>,
    %31 = vector.broadcast %7 : vector<128x1xf32> to vector<128x128xf32>
    %32 = arith.mulf %21, %31 : vector<128x128xf32>
    %c0_19 = arith.constant 0 : index
    %c0_20 = arith.constant 0 : index
    %c0_21 = arith.constant 0 : index
    %33 = vector.load %arg8[%c0_19, %c0_20, %c0_21] : memref<1x128x128xf32, #tpu.memory_space<vmem>>, vector<1x128x128xf32>
    %34 = vector.shape_cast %33 : vector<1x128x128xf32> to vector<128x128xf32>
    %35 = vector.shape_cast %32 : vector<128x128xf32> to vector<1x128x128xf32>
    tpu.vector_store %arg8[%c0_19, %c0_20, %c0_21], %35 {strides = array<i32>} : memref<1x128x128xf32, #tpu.memory_space<vmem>>, vector<1x128x128xf32>,
    return
  }
  func.func @transform_0(%arg0: i32, %arg1: i32) -> (i32, i32, i32) {
    %c0_i32 = arith.constant 0 : i32
    %c0_i32_0 = arith.constant 0 : i32
    return %arg0, %arg1, %c0_i32 : i32, i32, i32
  }
  func.func @transform_1(%arg0: i32, %arg1: i32) -> (i32, i32, i32) {
    %c0_i32 = arith.constant 0 : i32
    %c0_i32_0 = arith.constant 0 : i32
    %c0_i32_1 = arith.constant 0 : i32
    return %arg0, %c0_i32, %c0_i32_0 : i32, i32, i32
  }
  func.func @transform_2(%arg0: i32, %arg1: i32) -> (i32, i32, i32) {
    %c0_i32 = arith.constant 0 : i32
    %c0_i32_0 = arith.constant 0 : i32
    %c0_i32_1 = arith.constant 0 : i32
    return %arg0, %c0_i32, %c0_i32_0 : i32, i32, i32
  }
  func.func @transform_3(%arg0: i32, %arg1: i32) -> (i32, i32, i32) {
    %c0_i32 = arith.constant 0 : i32
    %c0_i32_0 = arith.constant 0 : i32
    return %arg0, %arg1, %c0_i32 : i32, i32, i32
  }
  func.func @transform_4(%arg0: i32, %arg1: i32) -> (i32, i32) {
    %c0_i32 = arith.constant 0 : i32
    %c0_i32_0 = arith.constant 0 : i32
    %c0_i32_1 = arith.constant 0 : i32
    return %c0_i32, %c0_i32_0 : i32, i32
  }
  func.func @transform_5(%arg0: i32, %arg1: i32) -> (i32, i32, i32) {
    %c0_i32 = arith.constant 0 : i32
    %c0_i32_0 = arith.constant 0 : i32
    return %arg0, %arg1, %c0_i32 : i32, i32, i32
  }
  func.func @transform_6(%arg0: i32, %arg1: i32) -> (i32, i32, i32) {
    %c0_i32 = arith.constant 0 : i32
    %c0_i32_0 = arith.constant 0 : i32
    return %arg0, %arg1, %c0_i32 : i32, i32, i32
  }
}

</mosaic_0001>

<llo_original>
// kernel: tpu_custom_call.1
$region0: #{tpu_custom_call.1}
  #allocation0 [shape = 'u32[]', space=smem, size = 0x4, offset = 0x4, fixed_abs, tag = 'smem constant byte address 0x4 - core index']
  #allocation1 [shape = 'u32[144,128]{1,0:T(1,128)}', space=vmem, size = 0x12000, scoped, tag = 'internal scratch']
  %s0 = inlined_call_operand.vmem [shape: bf16[2,128,128], index: 0, kind: input, shape index: {}]
  %s1 = inlined_call_operand.vmem [shape: bf16[2,128,128], index: 1, kind: input, shape index: {}]
  %s2 = inlined_call_operand.vmem [shape: f32[2,1,128], index: 2, kind: input, shape index: {}]
  %s3 = inlined_call_operand.vmem [shape: f32[2,128,1], index: 3, kind: input, shape index: {}]
  %s4 = inlined_call_operand.vmem [shape: f32[1,128], index: 4, kind: input, shape index: {}]
  %s5 = inlined_call_operand.hbm [shape: f32[2,128,128], index: 5, kind: output, shape index: {0}]
  %s6 = inlined_call_operand.hbm [shape: f32[2,128,128], index: 6, kind: output, shape index: {1}]
  %7 = xla_tuple %s5, %s6
  %s8 = sld [smem:[#allocation0]]
  $region61: #{tpu_custom_call.1} parent=0
    _
  %s10 = ssub.s32 1, %s8
  %s11 = scalar_select 0, %s10, %s8
  $region1: #{tpu_custom_call.1} parent=0
    #allocation2 [shape = 'u8[131072]{0}', space=vmem, size = 0x20000, scoped, tag = 'output window, operand 0']
    #allocation3 [shape = 's32[2]{0}', space=sflag, size = 0x8, scoped, tag = 'scoped memory for tpu_custom_call.1']
    #allocation4 [shape = 'u8[131072]{0}', space=vmem, size = 0x20000, scoped, tag = 'output window, operand 1']
    #allocation5 [shape = 's32[2]{0}', space=sflag, size = 0x8, scoped, tag = 'scoped memory for tpu_custom_call.1']
    %12 = vsyncpa [#allocation3], 0
    %s13 = scalar_lea.sflag [#allocation3], 1
    %14 = vsyncpa %s13, 0
    %15 = vsyncpa [#allocation5], 0
    %s16 = scalar_lea.sflag [#allocation5], 1
    %17 = vsyncpa %s16, 0
    loop: start=0, step=1, limit=4
    $region2: #{tpu_custom_call.1} parent=1 // loop_pre_header
      _
    $region3: #{tpu_custom_call.1} parent=1 // loop_header
      %s19 = sphi 0, %s23
      %p20 = scmp.ge.s32.totalorder %s19, 4
      %s26 = sphi 0, %s38
      %s27 = sphi 0, %s34
      %s28 = sphi 0, %s26
      %s29 = sphi 0, %s27
      %s30 = sphi 0, %s28
      %s31 = sphi 0, %s29
      %s43 = sphi 0, %s45
      %s46 = sphi 0, %s43
      %s47 = sphi 0, %s46
      %s63 = sphi 0, %s47
      %s69 = sphi 0, %s71
      %s72 = sphi 0, %s69
      %s73 = sphi 0, %s72
      %s89 = sphi 0, %s73
      %s95 = sphi 0, %s97
      %s98 = sphi 0, %s95
      %s99 = sphi 0, %s98
      %s115 = sphi 0, %s99
      %s123 = sphi 0, %s125
      %s126 = sphi 0, %s123
      %s127 = sphi 0, %s126
      %s143 = sphi 0, %s127
      %s147 = sphi 0, %s147
      %s149 = sphi 0, %s147
      %s150 = sphi 0, %s149
      %s164 = sphi 0, %s150
      %s172 = sphi 0, %s174
      %s175 = sphi 0, %s172
      %s176 = sphi 0, %s175
      %s192 = sphi 0, %s176
      %s200 = sphi 0, %s202
      %s203 = sphi 0, %s200
      %s204 = sphi 0, %s203
      %s220 = sphi 0, %s204
    $region4: #{tpu_custom_call.1} parent=1 // loop_header_branch
      %22 = sbr.rel (%p20) target = $region8
    $region5: #{tpu_custom_call.1} parent=1 // loop_body
      %s24 = ssub.s32 %s19, 1
      %s25 = ssub.s32 %s19, 2
      %s32 = sadd.s32 1, %s27
      %p33 = scmp.ge.s32.totalorder %s32, 1
      %s34 = scalar_select %p33, 0, %s32
      %s35 = sadd.s32 1, %s26
      %s36 = scalar_select %p33, %s35, %s26
      %p37 = scmp.ge.s32.totalorder %s36, 2
      %s38 = scalar_select %p37, 0, %s36
      %s39 = ssub.s32 %s26, %s38
      %s40 = ssub.s32 %s27, %s34
      %s41 = sor.u32 %s39, %s40
      %p42 = scmp.eq.s32.totalorder %s41, 0
      %s44 = sadd.s32 %s43, 1
      %s45 = scalar_select %p42, %s43, %s44
      %p48 = pneg %p42
      %p49 = scmp.eq.s32.totalorder %s19, 1
      %p50 = por %p48, %p49
      %p51 = scmp.ne.s32.totalorder %s43, %s46
      %p52 = scmp.eq.s32.totalorder %s19, 0
      %p53 = por %p51, %p52
      %p54 = scmp.ne.s32.totalorder %s43, %s46
      %p55 = scmp.eq.s32.totalorder %s24, 1
      %p56 = por %p54, %p55
      %p57 = scmp.ne.s32.totalorder %s46, %s47
      %p58 = scmp.eq.s32.totalorder %s24, 0
      %p59 = por %p57, %p58
      %p60 = scmp.ne.s32.totalorder %s46, %s47
      %p61 = scmp.eq.s32.totalorder %s25, 1
      %p62 = por %p60, %p61
      %p64 = scmp.ne.s32.totalorder %s47, %s63
      %p65 = scmp.eq.s32.totalorder %s25, 0
      %p66 = por %p64, %p65
      %s67 = ssub.s32 %s26, %s38
      %p68 = scmp.eq.s32.totalorder %s67, 0
      %s70 = sadd.s32 %s69, 1
      %s71 = scalar_select %p68, %s69, %s70
      %p74 = pneg %p68
      %p75 = scmp.eq.s32.totalorder %s19, 1
      %p76 = por %p74, %p75
      %p77 = scmp.ne.s32.totalorder %s69, %s72
      %p78 = scmp.eq.s32.totalorder %s19, 0
      %p79 = por %p77, %p78
      %p80 = scmp.ne.s32.totalorder %s69, %s72
      %p81 = scmp.eq.s32.totalorder %s24, 1
      %p82 = por %p80, %p81
      %p83 = scmp.ne.s32.totalorder %s72, %s73
      %p84 = scmp.eq.s32.totalorder %s24, 0
      %p85 = por %p83, %p84
      %p86 = scmp.ne.s32.totalorder %s72, %s73
      %p87 = scmp.eq.s32.totalorder %s25, 1
      %p88 = por %p86, %p87
      %p90 = scmp.ne.s32.totalorder %s73, %s89
      %p91 = scmp.eq.s32.totalorder %s25, 0
      %p92 = por %p90, %p91
      %s93 = ssub.s32 %s26, %s38
      %p94 = scmp.eq.s32.totalorder %s93, 0
      %s96 = sadd.s32 %s95, 1
      %s97 = scalar_select %p94, %s95, %s96
      %p100 = pneg %p94
      %p101 = scmp.eq.s32.totalorder %s19, 1
      %p102 = por %p100, %p101
      %p103 = scmp.ne.s32.totalorder %s95, %s98
      %p104 = scmp.eq.s32.totalorder %s19, 0
      %p105 = por %p103, %p104
      %p106 = scmp.ne.s32.totalorder %s95, %s98
      %p107 = scmp.eq.s32.totalorder %s24, 1
      %p108 = por %p106, %p107
      %p109 = scmp.ne.s32.totalorder %s98, %s99
      %p110 = scmp.eq.s32.totalorder %s24, 0
      %p111 = por %p109, %p110
      %p112 = scmp.ne.s32.totalorder %s98, %s99
      %p113 = scmp.eq.s32.totalorder %s25, 1
      %p114 = por %p112, %p113
      %p116 = scmp.ne.s32.totalorder %s99, %s115
      %p117 = scmp.eq.s32.totalorder %s25, 0
      %p118 = por %p116, %p117
      %s119 = ssub.s32 %s26, %s38
      %s120 = ssub.s32 %s27, %s34
      %s121 = sor.u32 %s119, %s120
      %p122 = scmp.eq.s32.totalorder %s121, 0
      %s124 = sadd.s32 %s123, 1
      %s125 = scalar_select %p122, %s123, %s124
      %p128 = pneg %p122
      %p129 = scmp.eq.s32.totalorder %s19, 1
      %p130 = por %p128, %p129
      %p131 = scmp.ne.s32.totalorder %s123, %s126
      %p132 = scmp.eq.s32.totalorder %s19, 0
      %p133 = por %p131, %p132
      %p134 = scmp.ne.s32.totalorder %s123, %s126
      %p135 = scmp.eq.s32.totalorder %s24, 1
      %p136 = por %p134, %p135
      %p137 = scmp.ne.s32.totalorder %s126, %s127
      %p138 = scmp.eq.s32.totalorder %s24, 0
      %p139 = por %p137, %p138
      %p140 = scmp.ne.s32.totalorder %s126, %s127
      %p141 = scmp.eq.s32.totalorder %s25, 1
      %p142 = por %p140, %p141
      %p144 = scmp.ne.s32.totalorder %s127, %s143
      %p145 = scmp.eq.s32.totalorder %s25, 0
      %p146 = por %p144, %p145
      %s148 = sadd.s32 %s147, 1
      %p151 = scmp.eq.s32.totalorder %s19, 1
      %p152 = scmp.ne.s32.totalorder %s147, %s149
      %p153 = scmp.eq.s32.totalorder %s19, 0
      %p154 = por %p152, %p153
      %p155 = scmp.ne.s32.totalorder %s147, %s149
      %p156 = scmp.eq.s32.totalorder %s24, 1
      %p157 = por %p155, %p156
      %p158 = scmp.ne.s32.totalorder %s149, %s150
      %p159 = scmp.eq.s32.totalorder %s24, 0
      %p160 = por %p158, %p159
      %p161 = scmp.ne.s32.totalorder %s149, %s150
      %p162 = scmp.eq.s32.totalorder %s25, 1
      %p163 = por %p161, %p162
      %p165 = scmp.ne.s32.totalorder %s150, %s164
      %p166 = scmp.eq.s32.totalorder %s25, 0
      %p167 = por %p165, %p166
      %s168 = ssub.s32 %s26, %s38
      %s169 = ssub.s32 %s27, %s34
      %s170 = sor.u32 %s168, %s169
      %p171 = scmp.eq.s32.totalorder %s170, 0
      %s173 = sadd.s32 %s172, 1
      %s174 = scalar_select %p171, %s172, %s173
      %p177 = pneg %p171
      %p178 = scmp.eq.s32.totalorder %s19, 1
      %p179 = por %p177, %p178
      %p180 = scmp.ne.s32.totalorder %s172, %s175
      %p181 = scmp.eq.s32.totalorder %s19, 0
      %p182 = por %p180, %p181
      %p183 = scmp.ne.s32.totalorder %s172, %s175
      %p184 = scmp.eq.s32.totalorder %s24, 1
      %p185 = por %p183, %p184
      %p186 = scmp.ne.s32.totalorder %s175, %s176
      %p187 = scmp.eq.s32.totalorder %s24, 0
      %p188 = por %p186, %p187
      %p189 = scmp.ne.s32.totalorder %s175, %s176
      %p190 = scmp.eq.s32.totalorder %s25, 1
      %p191 = por %p189, %p190
      %p193 = scmp.ne.s32.totalorder %s176, %s192
      %p194 = scmp.eq.s32.totalorder %s25, 0
      %p195 = por %p193, %p194
      %s196 = ssub.s32 %s26, %s38
      %s197 = ssub.s32 %s27, %s34
      %s198 = sor.u32 %s196, %s197
      %p199 = scmp.eq.s32.totalorder %s198, 0
      %s201 = sadd.s32 %s200, 1
      %s202 = scalar_select %p199, %s200, %s201
      %p205 = pneg %p199
      %p206 = scmp.eq.s32.totalorder %s19, 1
      %p207 = por %p205, %p206
      %p208 = scmp.ne.s32.totalorder %s200, %s203
      %p209 = scmp.eq.s32.totalorder %s19, 0
      %p210 = por %p208, %p209
      %p211 = scmp.ne.s32.totalorder %s200, %s203
      %p212 = scmp.eq.s32.totalorder %s24, 1
      %p213 = por %p211, %p212
      %p214 = scmp.ne.s32.totalorder %s203, %s204
      %p215 = scmp.eq.s32.totalorder %s24, 0
      %p216 = por %p214, %p215
      %p217 = scmp.ne.s32.totalorder %s203, %s204
      %p218 = scmp.eq.s32.totalorder %s25, 1
      %p219 = por %p217, %p218
      %p221 = scmp.ne.s32.totalorder %s204, %s220
      %p222 = scmp.eq.s32.totalorder %s25, 0
      %p223 = por %p221, %p222
      %p224 = scmp.le.s32.totalorder 1, %s19
      %p225 = scmp.lt.s32.totalorder %s19, 3
      %p226 = pnand %p224, %p225
      %p227 = pneg %p226
      // Predicated region
      $region9: #{tpu_custom_call.1} parent=5 // pred_check
        _
      $region10: #{tpu_custom_call.1} parent=5 // pred_check_branch
        %229 = sbr.rel (%p226) target = $region12
      $region11: #{tpu_custom_call.1} parent=5 // pred_region
        %s230 = ssub.s32 %s19, 1
        // Predicated region
        $region13: #{tpu_custom_call.1} parent=11 // pred_check
          %p231 = pneg %p160
        $region14: #{tpu_custom_call.1} parent=11 // pred_check_branch
          %233 = sbr.rel (%p231) target = $region16
        $region15: #{tpu_custom_call.1} parent=11 // pred_region
          _
        $region16: #{tpu_custom_call.1} parent=11 // pred_fallthru
          _
      $region12: #{tpu_custom_call.1} parent=5 // pred_fallthru
        _
      %p234 = scmp.lt.s32.totalorder %s19, 2
      // Predicated region
      $region17: #{tpu_custom_call.1} parent=5 // pred_check
        %p235 = pneg %p234
      $region18: #{tpu_custom_call.1} parent=5 // pred_check_branch
        %237 = sbr.rel (%p235) target = $region20
      $region19: #{tpu_custom_call.1} parent=5 // pred_region
        // Predicated region
        $region21: #{tpu_custom_call.1} parent=19 // pred_check
          %p238 = pneg %p53
        $region22: #{tpu_custom_call.1} parent=19 // pred_check_branch
          %240 = sbr.rel (%p238) target = $region24
        $region23: #{tpu_custom_call.1} parent=19 // pred_region
          %s241 = smul.u32 16, %s27
          %p242 = scmp.lt.s32.totalorder %s26, 1
          %s243 = scalar_select %p242, %s26, 1
          %p244 = scmp.lt.s32.totalorder %s241, 15
          %s245 = scalar_select %p244, %s241, 15
          %s246 = smul.addr %s243, 16
          %s247 = sadd.s32 %s245, %s246
          %s248 = smul.addr %s247, 4
          %s249 = scalar_lea.vmem %s0, %s248
          %s250 = smul.u32 16, %s27
        $region24: #{tpu_custom_call.1} parent=19 // pred_fallthru
          _
        // Predicated region
        $region25: #{tpu_custom_call.1} parent=19 // pred_check
          %p251 = pneg %p79
        $region26: #{tpu_custom_call.1} parent=19 // pred_check_branch
          %253 = sbr.rel (%p251) target = $region28
        $region27: #{tpu_custom_call.1} parent=19 // pred_region
          %p254 = scmp.lt.s32.totalorder %s26, 1
          %s255 = scalar_select %p254, %s26, 1
          %s256 = smul.addr %s255, 16
          %s257 = smul.addr %s256, 4
          %s258 = scalar_lea.vmem %s1, %s257
        $region28: #{tpu_custom_call.1} parent=19 // pred_fallthru
          _
        // Predicated region
        $region29: #{tpu_custom_call.1} parent=19 // pred_check
          %p259 = pneg %p105
        $region30: #{tpu_custom_call.1} parent=19 // pred_check_branch
          %261 = sbr.rel (%p259) target = $region32
        $region31: #{tpu_custom_call.1} parent=19 // pred_region
          %p262 = scmp.lt.s32.totalorder %s26, 1
          %s263 = scalar_select %p262, %s26, 1
          %s264 = scalar_lea.vmem %s2, %s263
        $region32: #{tpu_custom_call.1} parent=19 // pred_fallthru
          _
        // Predicated region
        $region33: #{tpu_custom_call.1} parent=19 // pred_check
          %p265 = pneg %p133
        $region34: #{tpu_custom_call.1} parent=19 // pred_check_branch
          %267 = sbr.rel (%p265) target = $region36
        $region35: #{tpu_custom_call.1} parent=19 // pred_region
          %s268 = smul.u32 16, %s27
          %p269 = scmp.lt.s32.totalorder %s26, 1
          %s270 = scalar_select %p269, %s26, 1
          %p271 = scmp.lt.s32.totalorder %s268, 15
          %s272 = scalar_select %p271, %s268, 15
          %s273 = smul.addr %s270, 16
          %s274 = sadd.s32 %s272, %s273
          %s275 = smul.addr %s274, 8
          %s276 = scalar_lea.vmem %s3, %s275
          %s277 = smul.u32 16, %s27
        $region36: #{tpu_custom_call.1} parent=19 // pred_fallthru
          _
      $region20: #{tpu_custom_call.1} parent=5 // pred_fallthru
        _
      %p278 = scmp.le.s32.totalorder 1, %s19
      %p279 = scmp.lt.s32.totalorder %s19, 3
      %p280 = pnand %p278, %p279
      %p281 = pneg %p280
      // Predicated region
      $region37: #{tpu_custom_call.1} parent=5 // pred_check
        _
      $region38: #{tpu_custom_call.1} parent=5 // pred_check_branch
        %283 = sbr.rel (%p280) target = $region40
      $region39: #{tpu_custom_call.1} parent=5 // pred_region
        %s284 = ssub.s32 %s19, 1
        %s285 = smul.u32 16, %s29
        %p286 = scmp.lt.s32.totalorder %s28, 1
        %s287 = scalar_select %p286, %s28, 1
        %p288 = scmp.lt.s32.totalorder %s285, 15
        %s289 = scalar_select %p288, %s285, 15
        %s290 = smul.addr %s287, 16
        %s291 = sadd.s32 %s289, %s290
        %s292 = smul.addr %s291, 4
        %s293 = scalar_lea.vmem %s0, %s292
        %p294 = pneg %p59
        %p295 = pneg %p56
        %p296 = scmp.lt.s32.totalorder %s28, 1
        %s297 = scalar_select %p296, %s28, 1
        %s298 = smul.addr %s297, 16
        %s299 = smul.addr %s298, 4
        %s300 = scalar_lea.vmem %s1, %s299
        %p301 = pneg %p85
        %p302 = pneg %p82
        %p303 = scmp.lt.s32.totalorder %s28, 1
        %s304 = scalar_select %p303, %s28, 1
        %s305 = scalar_lea.vmem %s2, %s304
        %p306 = pneg %p111
        %p307 = pneg %p108
        %s308 = smul.u32 16, %s29
        %p309 = scmp.lt.s32.totalorder %s28, 1
        %s310 = scalar_select %p309, %s28, 1
        %p311 = scmp.lt.s32.totalorder %s308, 15
        %s312 = scalar_select %p311, %s308, 15
        %s313 = smul.addr %s310, 16
        %s314 = sadd.s32 %s312, %s313
        %s315 = smul.addr %s314, 8
        %s316 = scalar_lea.vmem %s3, %s315
        %p317 = pneg %p139
        %p318 = pneg %p136
        %p319 = pneg %p160
        %p320 = pneg %p157
        %p321 = pneg %p188
        %p322 = pneg %p185
        %s323 = sand.u32 %s175, 1
        %s324 = scalar_lea.sflag [#allocation3], %s323
        %s325 = sand.u32 %s175, 1
        %s326 = smul.addr %s325, 128
        %s327 = scalar_lea.vmem [#allocation2], %s326
        %p328 = pneg %p216
        %p329 = pneg %p213
        %s330 = sand.u32 %s203, 1
        %s331 = scalar_lea.sflag [#allocation5], %s330
        %s332 = sand.u32 %s203, 1
        %s333 = smul.addr %s332, 128
        %s334 = scalar_lea.vmem [#allocation4], %s333
        %s335 = smul.u32 16, %s29
        %p336 = scmp.lt.s32.totalorder %s28, 1
        %s337 = scalar_select %p336, %s28, 1
        %p338 = scmp.lt.s32.totalorder %s335, 15
        %s339 = scalar_select %p338, %s335, 15
        %s340 = smul.addr %s337, 16
        %s341 = sadd.s32 %s339, %s340
        %s342 = smul.addr %s341, 4
        %s343 = scalar_lea.vmem %s0, %s342
        %s344 = smul.u32 16, %s29
        %p345 = scmp.lt.s32.totalorder %s28, 1
        %s346 = scalar_select %p345, %s28, 1
        %s347 = smul.addr %s346, 16
        %s348 = smul.addr %s347, 4
        %s349 = scalar_lea.vmem %s1, %s348
        %p350 = scmp.lt.s32.totalorder %s28, 1
        %s351 = scalar_select %p350, %s28, 1
        %s352 = scalar_lea.vmem %s2, %s351
        %s353 = smul.u32 16, %s29
        %p354 = scmp.lt.s32.totalorder %s28, 1
        %s355 = scalar_select %p354, %s28, 1
        %p356 = scmp.lt.s32.totalorder %s353, 15
        %s357 = scalar_select %p356, %s353, 15
        %s358 = smul.addr %s355, 16
        %s359 = sadd.s32 %s357, %s358
        %s360 = smul.addr %s359, 8
        %s361 = scalar_lea.vmem %s3, %s360
        %s362 = smul.u32 16, %s29
        %s363 = smul.u32 16, %s29
        %s364 = smul.u32 16, %s29
        %v366 = vld [vmem:[%s343] sm:$0xf]
        %v367 = vld [vmem:[%s343 + $0x4] sm:$0xf]
        %v368 = vld [vmem:[%s343 + $0x8] sm:$0xf]
        %v369 = vld [vmem:[%s343 + $0xc] sm:$0xf]
        %v370 = vld [vmem:[%s343 + $0x10] sm:$0xf]
        %v371 = vld [vmem:[%s343 + $0x14] sm:$0xf]
        %v372 = vld [vmem:[%s343 + $0x18] sm:$0xf]
        %v373 = vld [vmem:[%s343 + $0x1c] sm:$0xf]
        %v374 = vld [vmem:[%s343 + $0x20] sm:$0xf]
        %v375 = vld [vmem:[%s343 + $0x24] sm:$0xf]
        %v376 = vld [vmem:[%s343 + $0x28] sm:$0xf]
        %v377 = vld [vmem:[%s343 + $0x2c] sm:$0xf]
        %v378 = vld [vmem:[%s343 + $0x30] sm:$0xf]
        %v379 = vld [vmem:[%s343 + $0x34] sm:$0xf]
        %v380 = vld [vmem:[%s343 + $0x38] sm:$0xf]
        %v381 = vld [vmem:[%s343 + $0x3c] sm:$0xf]
        %v382 = vld [vmem:[%s349] sm:$0xf]
        %v383 = vld [vmem:[%s349 + $0x4] sm:$0xf]
        %v384 = vld [vmem:[%s349 + $0x8] sm:$0xf]
        %v385 = vld [vmem:[%s349 + $0xc] sm:$0xf]
        %v386 = vld [vmem:[%s349 + $0x10] sm:$0xf]
        %v387 = vld [vmem:[%s349 + $0x14] sm:$0xf]
        %v388 = vld [vmem:[%s349 + $0x18] sm:$0xf]
        %v389 = vld [vmem:[%s349 + $0x1c] sm:$0xf]
        %v390 = vld [vmem:[%s349 + $0x20] sm:$0xf]
        %v391 = vld [vmem:[%s349 + $0x24] sm:$0xf]
        %v392 = vld [vmem:[%s349 + $0x28] sm:$0xf]
        %v393 = vld [vmem:[%s349 + $0x2c] sm:$0xf]
        %v394 = vld [vmem:[%s349 + $0x30] sm:$0xf]
        %v395 = vld [vmem:[%s349 + $0x34] sm:$0xf]
        %v396 = vld [vmem:[%s349 + $0x38] sm:$0xf]
        %v397 = vld [vmem:[%s349 + $0x3c] sm:$0xf]
        %v398 = vld [vmem:[%s352] sm:$0x1]
        %v399 = vld [vmem:[%s361] sm:$0xff]
        %v400 = vld [vmem:[%s361 + $0x8] sm:$0xff]
        %v401 = vld [vmem:[%s361 + $0x10] sm:$0xff]
        %v402 = vld [vmem:[%s361 + $0x18] sm:$0xff]
        %v403 = vld [vmem:[%s361 + $0x20] sm:$0xff]
        %v404 = vld [vmem:[%s361 + $0x28] sm:$0xff]
        %v405 = vld [vmem:[%s361 + $0x30] sm:$0xff]
        %v406 = vld [vmem:[%s361 + $0x38] sm:$0xff]
        %v407 = vld [vmem:[%s361 + $0x40] sm:$0xff]
        %v408 = vld [vmem:[%s361 + $0x48] sm:$0xff]
        %v409 = vld [vmem:[%s361 + $0x50] sm:$0xff]
        %v410 = vld [vmem:[%s361 + $0x58] sm:$0xff]
        %v411 = vld [vmem:[%s361 + $0x60] sm:$0xff]
        %v412 = vld [vmem:[%s361 + $0x68] sm:$0xff]
        %v413 = vld [vmem:[%s361 + $0x70] sm:$0xff]
        %v414 = vld [vmem:[%s361 + $0x78] sm:$0xff]
        %v415 = vld [vmem:[%s4] sm:$0x1]
        %v417 = vlaneseq
        %v418 = vshrl.u32 %v417, 7
        %v419 = vsub.s32 0, %v418
        %v420 = vrot.slane %v398, %v419
        %v438 = vunpack.c.l.b16 %v366
        %v439 = vunpack.c.l.b16 %v367
        %v440 = vunpack.c.l.b16 %v368
        %v441 = vunpack.c.l.b16 %v369
        %v442 = vunpack.c.l.b16 %v370
        %v443 = vunpack.c.l.b16 %v371
        %v444 = vunpack.c.l.b16 %v372
        %v445 = vunpack.c.l.b16 %v373
        %v446 = vunpack.c.l.b16 %v374
        %v447 = vunpack.c.l.b16 %v375
        %v448 = vunpack.c.l.b16 %v376
        %v449 = vunpack.c.l.b16 %v377
        %v450 = vunpack.c.l.b16 %v378
        %v451 = vunpack.c.l.b16 %v379
        %v452 = vunpack.c.l.b16 %v380
        %v453 = vunpack.c.l.b16 %v381
        %v454 = vpack.c.b16 %v439, %v438
        %v455 = vpack.c.b16 %v441, %v440
        %v456 = vpack.c.b16 %v443, %v442
        %v457 = vpack.c.b16 %v445, %v444
        %v458 = vpack.c.b16 %v447, %v446
        %v459 = vpack.c.b16 %v449, %v448
        %v460 = vpack.c.b16 %v451, %v450
        %v461 = vpack.c.b16 %v453, %v452
        %v486 = vunpack.c.l.b16 %v382
        %v487 = vunpack.c.l.b16 %v383
        %v488 = vunpack.c.l.b16 %v384
        %v489 = vunpack.c.l.b16 %v385
        %v490 = vunpack.c.l.b16 %v386
        %v491 = vunpack.c.l.b16 %v387
        %v492 = vunpack.c.l.b16 %v388
        %v493 = vunpack.c.l.b16 %v389
        %v494 = vunpack.c.l.b16 %v390
        %v495 = vunpack.c.l.b16 %v391
        %v496 = vunpack.c.l.b16 %v392
        %v497 = vunpack.c.l.b16 %v393
        %v498 = vunpack.c.l.b16 %v394
        %v499 = vunpack.c.l.b16 %v395
        %v500 = vunpack.c.l.b16 %v396
        %v501 = vunpack.c.l.b16 %v397
        %v502 = vpack.c.b16 %v487, %v486
        %v503 = vpack.c.b16 %v489, %v488
        %v504 = vpack.c.b16 %v491, %v490
        %v505 = vpack.c.b16 %v493, %v492
        %v506 = vpack.c.b16 %v495, %v494
        %v507 = vpack.c.b16 %v497, %v496
        %v508 = vpack.c.b16 %v499, %v498
        %v509 = vpack.c.b16 %v501, %v500
        %518 = vmatprep.subr.bf16.mxu0 0
        %519 = vmatpush1.bf16.xpose.msra.mxu0 %v502
        %520 = vmatprep.subr.bf16.mxu0 0
        %521 = vmatpush1.bf16.xpose.msra.mxu0 %v503
        %522 = vmatprep.subr.bf16.mxu0 0
        %523 = vmatpush1.bf16.xpose.msra.mxu0 %v504
        %524 = vmatprep.subr.bf16.mxu0 0
        %525 = vmatpush1.bf16.xpose.msra.mxu0 %v505
        %526 = vmatprep.subr.bf16.mxu0 0
        %527 = vmatpush1.bf16.xpose.msra.mxu0 %v506
        %528 = vmatprep.subr.bf16.mxu0 0
        %529 = vmatpush1.bf16.xpose.msra.mxu0 %v507
        %530 = vmatprep.subr.bf16.mxu0 0
        %531 = vmatpush1.bf16.xpose.msra.mxu0 %v508
        %532 = vmatprep.subr.bf16.mxu0 0
        %533 = vmatpush1.bf16.xpose.msra.mxu0 %v509
        %534 = vmatprep.subr.bf16.mxu0 0
        %535 = vmatpush1.bf16.xpose.msra.mxu0 0
        %536 = vmatprep.subr.bf16.mxu0 0
        %537 = vmatpush1.bf16.xpose.msra.mxu0 0
        %538 = vmatprep.subr.bf16.mxu0 0
        %539 = vmatpush1.bf16.xpose.msra.mxu0 0
        %540 = vmatprep.subr.bf16.mxu0 0
        %541 = vmatpush1.bf16.xpose.msra.mxu0 0
        %542 = vmatprep.subr.bf16.mxu0 0
        %543 = vmatpush1.bf16.xpose.msra.mxu0 0
        %544 = vmatprep.subr.bf16.mxu0 0
        %545 = vmatpush1.bf16.xpose.msra.mxu0 0
        %546 = vmatprep.subr.bf16.mxu0 0
        %547 = vmatpush1.bf16.xpose.msra.mxu0 0
        %548 = vmatprep.subr.bf16.mxu0 0
        %549 = vmatpush1.bf16.xpose.msra.mxu0 0
        %550 = vmatprep.mubr.bf16.mxu0 0
        %551 = vmatmul.mubr.bf16.gmra.mrb[0].mxu0 %v454
        %v552 = vpop.f32.mrb[0].mxu0
        %v553 = vadd.f32 %v420, %v552
        %v554 = vpop.f32.mrb[0].mxu0
        %v555 = vpop.f32.mrb[0].mxu0
        %v556 = vadd.f32 %v420, %v555
        %v557 = vpop.f32.mrb[0].mxu0
        %558 = vmatprep.mubr.bf16.mxu0 0
        %559 = vmatmul.mubr.bf16.gmra.mrb[0].mxu0 %v455
        %v560 = vpop.f32.mrb[0].mxu0
        %v561 = vadd.f32 %v420, %v560
        %v562 = vpop.f32.mrb[0].mxu0
        %v563 = vpop.f32.mrb[0].mxu0
        %v564 = vadd.f32 %v420, %v563
        %v565 = vpop.f32.mrb[0].mxu0
        %566 = vmatprep.mubr.bf16.mxu0 0
        %567 = vmatmul.mubr.bf16.gmra.mrb[0].mxu0 %v456
        %v568 = vpop.f32.mrb[0].mxu0
        %v569 = vadd.f32 %v420, %v568
        %v570 = vpop.f32.mrb[0].mxu0
        %v571 = vpop.f32.mrb[0].mxu0
        %v572 = vadd.f32 %v420, %v571
        %v573 = vpop.f32.mrb[0].mxu0
        %574 = vmatprep.mubr.bf16.mxu0 0
        %575 = vmatmul.mubr.bf16.gmra.mrb[0].mxu0 %v457
        %v576 = vpop.f32.mrb[0].mxu0
        %v577 = vadd.f32 %v420, %v576
        %v578 = vpop.f32.mrb[0].mxu0
        %v579 = vpop.f32.mrb[0].mxu0
        %v580 = vadd.f32 %v420, %v579
        %v581 = vpop.f32.mrb[0].mxu0
        %582 = vmatprep.mubr.bf16.mxu0 0
        %583 = vmatmul.mubr.bf16.gmra.mrb[0].mxu0 %v458
        %v584 = vpop.f32.mrb[0].mxu0
        %v585 = vadd.f32 %v420, %v584
        %v586 = vpop.f32.mrb[0].mxu0
        %v587 = vpop.f32.mrb[0].mxu0
        %v588 = vadd.f32 %v420, %v587
        %v589 = vpop.f32.mrb[0].mxu0
        %590 = vmatprep.mubr.bf16.mxu0 0
        %591 = vmatmul.mubr.bf16.gmra.mrb[0].mxu0 %v459
        %v592 = vpop.f32.mrb[0].mxu0
        %v593 = vadd.f32 %v420, %v592
        %v594 = vpop.f32.mrb[0].mxu0
        %v595 = vpop.f32.mrb[0].mxu0
        %v596 = vadd.f32 %v420, %v595
        %v597 = vpop.f32.mrb[0].mxu0
        %598 = vmatprep.mubr.bf16.mxu0 0
        %599 = vmatmul.mubr.bf16.gmra.mrb[0].mxu0 %v460
        %v600 = vpop.f32.mrb[0].mxu0
        %v601 = vadd.f32 %v420, %v600
        %v602 = vpop.f32.mrb[0].mxu0
        %v603 = vpop.f32.mrb[0].mxu0
        %v604 = vadd.f32 %v420, %v603
        %v605 = vpop.f32.mrb[0].mxu0
        %606 = vmatprep.mubr.bf16.mxu0 0
        %607 = vmatmul.mubr.bf16.gmra.mrb[0].mxu0 %v461
        %v608 = vpop.f32.mrb[0].mxu0
        %v609 = vadd.f32 %v420, %v608
        %v610 = vpop.f32.mrb[0].mxu0
        %v611 = vpop.f32.mrb[0].mxu0
        %v612 = vadd.f32 %v420, %v611
        %v613 = vpop.f32.mrb[0].mxu0
        %614 = vdwg.mxu0
        %615 = vmax.xlane.f32.xlu0 %v553
        %v616 = vpop.xlane.xlu0 %615
        %617 = vmax.xlane.f32.xlu0 %v556
        %v618 = vpop.xlane.xlu0 %617
        %619 = vmax.xlane.f32.xlu0 %v561
        %v620 = vpop.xlane.xlu0 %619
        %621 = vmax.xlane.f32.xlu0 %v564
        %v622 = vpop.xlane.xlu0 %621
        %623 = vmax.xlane.f32.xlu0 %v569
        %v624 = vpop.xlane.xlu0 %623
        %625 = vmax.xlane.f32.xlu0 %v572
        %v626 = vpop.xlane.xlu0 %625
        %627 = vmax.xlane.f32.xlu0 %v577
        %v628 = vpop.xlane.xlu0 %627
        %629 = vmax.xlane.f32.xlu0 %v580
        %v630 = vpop.xlane.xlu0 %629
        %631 = vmax.xlane.f32.xlu0 %v585
        %v632 = vpop.xlane.xlu0 %631
        %633 = vmax.xlane.f32.xlu0 %v588
        %v634 = vpop.xlane.xlu0 %633
        %635 = vmax.xlane.f32.xlu0 %v593
        %v636 = vpop.xlane.xlu0 %635
        %637 = vmax.xlane.f32.xlu0 %v596
        %v638 = vpop.xlane.xlu0 %637
        %639 = vmax.xlane.f32.xlu0 %v601
        %v640 = vpop.xlane.xlu0 %639
        %641 = vmax.xlane.f32.xlu0 %v604
        %v642 = vpop.xlane.xlu0 %641
        %643 = vmax.xlane.f32.xlu0 %v609
        %v644 = vpop.xlane.xlu0 %643
        %645 = vmax.xlane.f32.xlu0 %v612
        %v646 = vpop.xlane.xlu0 %645
        %v647 = vsub.f32 %v553, %v616
        %v648 = vsub.f32 %v556, %v618
        %v649 = vsub.f32 %v561, %v620
        %v650 = vsub.f32 %v564, %v622
        %v651 = vsub.f32 %v569, %v624
        %v652 = vsub.f32 %v572, %v626
        %v653 = vsub.f32 %v577, %v628
        %v654 = vsub.f32 %v580, %v630
        %v655 = vsub.f32 %v585, %v632
        %v656 = vsub.f32 %v588, %v634
        %v657 = vsub.f32 %v593, %v636
        %v658 = vsub.f32 %v596, %v638
        %v659 = vsub.f32 %v601, %v640
        %v660 = vsub.f32 %v604, %v642
        %v661 = vsub.f32 %v609, %v644
        %v662 = vsub.f32 %v612, %v646
        %v663 = vmul.f32 %v647, 1.442695
        %v664 = vpow.pop %v663
        %v665 = vmul.f32 %v648, 1.442695
        %v666 = vpow.pop %v665
        %v667 = vmul.f32 %v649, 1.442695
        %v668 = vpow.pop %v667
        %v669 = vmul.f32 %v650, 1.442695
        %v670 = vpow.pop %v669
        %v671 = vmul.f32 %v651, 1.442695
        %v672 = vpow.pop %v671
        %v673 = vmul.f32 %v652, 1.442695
        %v674 = vpow.pop %v673
        %v675 = vmul.f32 %v653, 1.442695
        %v676 = vpow.pop %v675
        %v677 = vmul.f32 %v654, 1.442695
        %v678 = vpow.pop %v677
        %v679 = vmul.f32 %v655, 1.442695
        %v680 = vpow.pop %v679
        %v681 = vmul.f32 %v656, 1.442695
        %v682 = vpow.pop %v681
        %v683 = vmul.f32 %v657, 1.442695
        %v684 = vpow.pop %v683
        %v685 = vmul.f32 %v658, 1.442695
        %v686 = vpow.pop %v685
        %v687 = vmul.f32 %v659, 1.442695
        %v688 = vpow.pop %v687
        %v689 = vmul.f32 %v660, 1.442695
        %v690 = vpow.pop %v689
        %v691 = vmul.f32 %v661, 1.442695
        %v692 = vpow.pop %v691
        %v693 = vmul.f32 %v662, 1.442695
        %v694 = vpow.pop %v693
        %695 = vadd.xlane.f32.xlu0 %v664
        %v696 = vpop.xlane.xlu0 %695
        %697 = vadd.xlane.f32.xlu0 %v666
        %v698 = vpop.xlane.xlu0 %697
        %699 = vadd.xlane.f32.xlu0 %v668
        %v700 = vpop.xlane.xlu0 %699
        %701 = vadd.xlane.f32.xlu0 %v670
        %v702 = vpop.xlane.xlu0 %701
        %703 = vadd.xlane.f32.xlu0 %v672
        %v704 = vpop.xlane.xlu0 %703
        %705 = vadd.xlane.f32.xlu0 %v674
        %v706 = vpop.xlane.xlu0 %705
        %707 = vadd.xlane.f32.xlu0 %v676
        %v708 = vpop.xlane.xlu0 %707
        %709 = vadd.xlane.f32.xlu0 %v678
        %v710 = vpop.xlane.xlu0 %709
        %711 = vadd.xlane.f32.xlu0 %v680
        %v712 = vpop.xlane.xlu0 %711
        %713 = vadd.xlane.f32.xlu0 %v682
        %v714 = vpop.xlane.xlu0 %713
        %715 = vadd.xlane.f32.xlu0 %v684
        %v716 = vpop.xlane.xlu0 %715
        %717 = vadd.xlane.f32.xlu0 %v686
        %v718 = vpop.xlane.xlu0 %717
        %719 = vadd.xlane.f32.xlu0 %v688
        %v720 = vpop.xlane.xlu0 %719
        %721 = vadd.xlane.f32.xlu0 %v690
        %v722 = vpop.xlane.xlu0 %721
        %723 = vadd.xlane.f32.xlu0 %v692
        %v724 = vpop.xlane.xlu0 %723
        %725 = vadd.xlane.f32.xlu0 %v694
        %v726 = vpop.xlane.xlu0 %725
        %v727 = vrcp.pop %v696
        %v728 = vrcp.pop %v698
        %v729 = vrcp.pop %v700
        %v730 = vrcp.pop %v702
        %v731 = vrcp.pop %v704
        %v732 = vrcp.pop %v706
        %v733 = vrcp.pop %v708
        %v734 = vrcp.pop %v710
        %v735 = vrcp.pop %v712
        %v736 = vrcp.pop %v714
        %v737 = vrcp.pop %v716
        %v738 = vrcp.pop %v718
        %v739 = vrcp.pop %v720
        %v740 = vrcp.pop %v722
        %v741 = vrcp.pop %v724
        %v742 = vrcp.pop %v726
        %v743 = vmul.f32 %v664, %v727
        %v744 = vmul.f32 %v666, %v728
        %v745 = vmul.f32 %v668, %v729
        %v746 = vmul.f32 %v670, %v730
        %v747 = vmul.f32 %v672, %v731
        %v748 = vmul.f32 %v674, %v732
        %v749 = vmul.f32 %v676, %v733
        %v750 = vmul.f32 %v678, %v734
        %v751 = vmul.f32 %v680, %v735
        %v752 = vmul.f32 %v682, %v736
        %v753 = vmul.f32 %v684, %v737
        %v754 = vmul.f32 %v686, %v738
        %v755 = vmul.f32 %v688, %v739
        %v756 = vmul.f32 %v690, %v740
        %v757 = vmul.f32 %v692, %v741
        %v758 = vmul.f32 %v694, %v742
        %v759 = vpack.c.bf16 %v744, %v743
        %v760 = vpack.c.bf16 %v746, %v745
        %v761 = vpack.c.bf16 %v748, %v747
        %v762 = vpack.c.bf16 %v750, %v749
        %v763 = vpack.c.bf16 %v752, %v751
        %v764 = vpack.c.bf16 %v754, %v753
        %v765 = vpack.c.bf16 %v756, %v755
        %v766 = vpack.c.bf16 %v758, %v757
        %767 = vmatprep.subr.bf16.mxu0 0
        %768 = vmatpush1.bf16.msra.mxu0 %v502
        %769 = vmatprep.subr.bf16.mxu0 0
        %770 = vmatpush1.bf16.msra.mxu0 %v503
        %771 = vmatprep.subr.bf16.mxu0 0
        %772 = vmatpush1.bf16.msra.mxu0 %v504
        %773 = vmatprep.subr.bf16.mxu0 0
        %774 = vmatpush1.bf16.msra.mxu0 %v505
        %775 = vmatprep.subr.bf16.mxu0 0
        %776 = vmatpush1.bf16.msra.mxu0 %v506
        %777 = vmatprep.subr.bf16.mxu0 0
        %778 = vmatpush1.bf16.msra.mxu0 %v507
        %779 = vmatprep.subr.bf16.mxu0 0
        %780 = vmatpush1.bf16.msra.mxu0 %v508
        %781 = vmatprep.subr.bf16.mxu0 0
        %782 = vmatpush1.bf16.msra.mxu0 %v509
        %783 = vmatprep.subr.bf16.mxu0 0
        %784 = vmatpush1.bf16.msra.mxu0 0
        %785 = vmatprep.subr.bf16.mxu0 0
        %786 = vmatpush1.bf16.msra.mxu0 0
        %787 = vmatprep.subr.bf16.mxu0 0
        %788 = vmatpush1.bf16.msra.mxu0 0
        %789 = vmatprep.subr.bf16.mxu0 0
        %790 = vmatpush1.bf16.msra.mxu0 0
        %791 = vmatprep.subr.bf16.mxu0 0
        %792 = vmatpush1.bf16.msra.mxu0 0
        %793 = vmatprep.subr.bf16.mxu0 0
        %794 = vmatpush1.bf16.msra.mxu0 0
        %795 = vmatprep.subr.bf16.mxu0 0
        %796 = vmatpush1.bf16.msra.mxu0 0
        %797 = vmatprep.subr.bf16.mxu0 0
        %798 = vmatpush1.bf16.msra.mxu0 0
        %799 = vmatprep.mubr.bf16.mxu0 0
        %800 = vmatmul.mubr.bf16.gmra.mrb[0].mxu0 %v759
        %v801 = vpop.f32.mrb[0].mxu0
        %v802 = vadd.f32 0.0, %v801
        %v803 = vpop.f32.mrb[0].mxu0
        %v804 = vpop.f32.mrb[0].mxu0
        %v805 = vadd.f32 0.0, %v804
        %v806 = vpop.f32.mrb[0].mxu0
        %807 = vmatprep.mubr.bf16.mxu0 0
        %808 = vmatmul.mubr.bf16.gmra.mrb[0].mxu0 %v760
        %v809 = vpop.f32.mrb[0].mxu0
        %v810 = vadd.f32 0.0, %v809
        %v811 = vpop.f32.mrb[0].mxu0
        %v812 = vpop.f32.mrb[0].mxu0
        %v813 = vadd.f32 0.0, %v812
        %v814 = vpop.f32.mrb[0].mxu0
        %815 = vmatprep.mubr.bf16.mxu0 0
        %816 = vmatmul.mubr.bf16.gmra.mrb[0].mxu0 %v761
        %v817 = vpop.f32.mrb[0].mxu0
        %v818 = vadd.f32 0.0, %v817
        %v819 = vpop.f32.mrb[0].mxu0
        %v820 = vpop.f32.mrb[0].mxu0
        %v821 = vadd.f32 0.0, %v820
        %v822 = vpop.f32.mrb[0].mxu0
        %823 = vmatprep.mubr.bf16.mxu0 0
        %824 = vmatmul.mubr.bf16.gmra.mrb[0].mxu0 %v762
        %v825 = vpop.f32.mrb[0].mxu0
        %v826 = vadd.f32 0.0, %v825
        %v827 = vpop.f32.mrb[0].mxu0
        %v828 = vpop.f32.mrb[0].mxu0
        %v829 = vadd.f32 0.0, %v828
        %v830 = vpop.f32.mrb[0].mxu0
        %831 = vmatprep.mubr.bf16.mxu0 0
        %832 = vmatmul.mubr.bf16.gmra.mrb[0].mxu0 %v763
        %v833 = vpop.f32.mrb[0].mxu0
        %v834 = vadd.f32 0.0, %v833
        %v835 = vpop.f32.mrb[0].mxu0
        %v836 = vpop.f32.mrb[0].mxu0
        %v837 = vadd.f32 0.0, %v836
        %v838 = vpop.f32.mrb[0].mxu0
        %839 = vmatprep.mubr.bf16.mxu0 0
        %840 = vmatmul.mubr.bf16.gmra.mrb[0].mxu0 %v764
        %v841 = vpop.f32.mrb[0].mxu0
        %v842 = vadd.f32 0.0, %v841
        %v843 = vpop.f32.mrb[0].mxu0
        %v844 = vpop.f32.mrb[0].mxu0
        %v845 = vadd.f32 0.0, %v844
        %v846 = vpop.f32.mrb[0].mxu0
        %847 = vmatprep.mubr.bf16.mxu0 0
        %848 = vmatmul.mubr.bf16.gmra.mrb[0].mxu0 %v765
        %v849 = vpop.f32.mrb[0].mxu0
        %v850 = vadd.f32 0.0, %v849
        %v851 = vpop.f32.mrb[0].mxu0
        %v852 = vpop.f32.mrb[0].mxu0
        %v853 = vadd.f32 0.0, %v852
        %v854 = vpop.f32.mrb[0].mxu0
        %855 = vmatprep.mubr.bf16.mxu0 0
        %856 = vmatmul.mubr.bf16.gmra.mrb[0].mxu0 %v766
        %v857 = vpop.f32.mrb[0].mxu0
        %v858 = vadd.f32 0.0, %v857
        %v859 = vpop.f32.mrb[0].mxu0
        %v860 = vpop.f32.mrb[0].mxu0
        %v861 = vadd.f32 0.0, %v860
        %v862 = vpop.f32.mrb[0].mxu0
        %863 = vdwg.mxu0
        %865 = vset.pattern.permute.xlu0 0
        %866 = vperm.xlu0 %865, %v399
        %v867 = vpop.permute.xlu0 %866
        %870 = vset.pattern.permute.xlu0 0
        %871 = vperm.xlu0 %870, %v400
        %v872 = vpop.permute.xlu0 %871
        %875 = vset.pattern.permute.xlu0 0
        %876 = vperm.xlu0 %875, %v401
        %v877 = vpop.permute.xlu0 %876
        %880 = vset.pattern.permute.xlu0 0
        %881 = vperm.xlu0 %880, %v402
        %v882 = vpop.permute.xlu0 %881
        %885 = vset.pattern.permute.xlu0 0
        %886 = vperm.xlu0 %885, %v403
        %v887 = vpop.permute.xlu0 %886
        %890 = vset.pattern.permute.xlu0 0
        %891 = vperm.xlu0 %890, %v404
        %v892 = vpop.permute.xlu0 %891
        %895 = vset.pattern.permute.xlu0 0
        %896 = vperm.xlu0 %895, %v405
        %v897 = vpop.permute.xlu0 %896
        %900 = vset.pattern.permute.xlu0 0
        %901 = vperm.xlu0 %900, %v406
        %v902 = vpop.permute.xlu0 %901
        %905 = vset.pattern.permute.xlu0 0
        %906 = vperm.xlu0 %905, %v407
        %v907 = vpop.permute.xlu0 %906
        %910 = vset.pattern.permute.xlu0 0
        %911 = vperm.xlu0 %910, %v408
        %v912 = vpop.permute.xlu0 %911
        %915 = vset.pattern.permute.xlu0 0
        %916 = vperm.xlu0 %915, %v409
        %v917 = vpop.permute.xlu0 %916
        %920 = vset.pattern.permute.xlu0 0
        %921 = vperm.xlu0 %920, %v410
        %v922 = vpop.permute.xlu0 %921
        %925 = vset.pattern.permute.xlu0 0
        %926 = vperm.xlu0 %925, %v411
        %v927 = vpop.permute.xlu0 %926
        %930 = vset.pattern.permute.xlu0 0
        %931 = vperm.xlu0 %930, %v412
        %v932 = vpop.permute.xlu0 %931
        %935 = vset.pattern.permute.xlu0 0
        %936 = vperm.xlu0 %935, %v413
        %v937 = vpop.permute.xlu0 %936
        %940 = vset.pattern.permute.xlu0 0
        %941 = vperm.xlu0 %940, %v414
        %v942 = vpop.permute.xlu0 %941
        %v944 = vmul.f32 %v802, %v867
        %v945 = vmul.f32 %v805, %v872
        %v946 = vmul.f32 %v810, %v877
        %v947 = vmul.f32 %v813, %v882
        %v948 = vmul.f32 %v818, %v887
        %v949 = vmul.f32 %v821, %v892
        %v950 = vmul.f32 %v826, %v897
        %v951 = vmul.f32 %v829, %v902
        %v952 = vmul.f32 %v834, %v907
        %v953 = vmul.f32 %v837, %v912
        %v954 = vmul.f32 %v842, %v917
        %v955 = vmul.f32 %v845, %v922
        %v956 = vmul.f32 %v850, %v927
        %v957 = vmul.f32 %v853, %v932
        %v958 = vmul.f32 %v858, %v937
        %v959 = vmul.f32 %v861, %v942
        %v961 = vlaneseq
        %v962 = vshrl.u32 %v961, 7
        %v963 = vsub.s32 0, %v962
        %v964 = vrot.slane %v415, %v963
        %v966 = vadd.f32 %v944, %v964
        %v967 = vadd.f32 %v945, %v964
        %v968 = vadd.f32 %v946, %v964
        %v969 = vadd.f32 %v947, %v964
        %v970 = vadd.f32 %v948, %v964
        %v971 = vadd.f32 %v949, %v964
        %v972 = vadd.f32 %v950, %v964
        %v973 = vadd.f32 %v951, %v964
        %v974 = vadd.f32 %v952, %v964
        %v975 = vadd.f32 %v953, %v964
        %v976 = vadd.f32 %v954, %v964
        %v977 = vadd.f32 %v955, %v964
        %v978 = vadd.f32 %v956, %v964
        %v979 = vadd.f32 %v957, %v964
        %v980 = vadd.f32 %v958, %v964
        %v981 = vadd.f32 %v959, %v964
        %982 = vst [vmem:[%s327] sm:$0xff] %v966
        %983 = vst [vmem:[%s327 + $0x8] sm:$0xff] %v967
        %984 = vst [vmem:[%s327 + $0x10] sm:$0xff] %v968
        %985 = vst [vmem:[%s327 + $0x18] sm:$0xff] %v969
        %986 = vst [vmem:[%s327 + $0x20] sm:$0xff] %v970
        %987 = vst [vmem:[%s327 + $0x28] sm:$0xff] %v971
        %988 = vst [vmem:[%s327 + $0x30] sm:$0xff] %v972
        %989 = vst [vmem:[%s327 + $0x38] sm:$0xff] %v973
        %990 = vst [vmem:[%s327 + $0x40] sm:$0xff] %v974
        %991 = vst [vmem:[%s327 + $0x48] sm:$0xff] %v975
        %992 = vst [vmem:[%s327 + $0x50] sm:$0xff] %v976
        %993 = vst [vmem:[%s327 + $0x58] sm:$0xff] %v977
        %994 = vst [vmem:[%s327 + $0x60] sm:$0xff] %v978
        %995 = vst [vmem:[%s327 + $0x68] sm:$0xff] %v979
        %996 = vst [vmem:[%s327 + $0x70] sm:$0xff] %v980
        %997 = vst [vmem:[%s327 + $0x78] sm:$0xff] %v981
        %v998 = vmul.f32 %v743, %v867
        %v999 = vmul.f32 %v744, %v872
        %v1000 = vmul.f32 %v745, %v877
        %v1001 = vmul.f32 %v746, %v882
        %v1002 = vmul.f32 %v747, %v887
        %v1003 = vmul.f32 %v748, %v892
        %v1004 = vmul.f32 %v749, %v897
        %v1005 = vmul.f32 %v750, %v902
        %v1006 = vmul.f32 %v751, %v907
        %v1007 = vmul.f32 %v752, %v912
        %v1008 = vmul.f32 %v753, %v917
        %v1009 = vmul.f32 %v754, %v922
        %v1010 = vmul.f32 %v755, %v927
        %v1011 = vmul.f32 %v756, %v932
        %v1012 = vmul.f32 %v757, %v937
        %v1013 = vmul.f32 %v758, %v942
        %1014 = vst [vmem:[%s334] sm:$0xff] %v998
        %1015 = vst [vmem:[%s334 + $0x8] sm:$0xff] %v999
        %1016 = vst [vmem:[%s334 + $0x10] sm:$0xff] %v1000
        %1017 = vst [vmem:[%s334 + $0x18] sm:$0xff] %v1001
        %1018 = vst [vmem:[%s334 + $0x20] sm:$0xff] %v1002
        %1019 = vst [vmem:[%s334 + $0x28] sm:$0xff] %v1003
        %1020 = vst [vmem:[%s334 + $0x30] sm:$0xff] %v1004
        %1021 = vst [vmem:[%s334 + $0x38] sm:$0xff] %v1005
        %1022 = vst [vmem:[%s334 + $0x40] sm:$0xff] %v1006
        %1023 = vst [vmem:[%s334 + $0x48] sm:$0xff] %v1007
        %1024 = vst [vmem:[%s334 + $0x50] sm:$0xff] %v1008
        %1025 = vst [vmem:[%s334 + $0x58] sm:$0xff] %v1009
        %1026 = vst [vmem:[%s334 + $0x60] sm:$0xff] %v1010
        %1027 = vst [vmem:[%s334 + $0x68] sm:$0xff] %v1011
        %1028 = vst [vmem:[%s334 + $0x70] sm:$0xff] %v1012
        %1029 = vst [vmem:[%s334 + $0x78] sm:$0xff] %v1013
        %s1030 = sand.u32 %s175, 1
        %s1031 = scalar_lea.sflag [#allocation3], %s1030
        %s1032 = sand.u32 %s175, 1
        %s1033 = smul.addr %s1032, 128
        %s1034 = scalar_lea.vmem [#allocation2], %s1033
        %s1035 = sand.u32 %s203, 1
        %s1036 = scalar_lea.sflag [#allocation5], %s1035
        %s1037 = sand.u32 %s203, 1
        %s1038 = smul.addr %s1037, 128
        %s1039 = scalar_lea.vmem [#allocation4], %s1038
        // Predicated region
        $region41: #{tpu_custom_call.1} parent=39 // pred_check
          %p1040 = pneg %p185
        $region42: #{tpu_custom_call.1} parent=39 // pred_check_branch
          %1042 = sbr.rel (%p1040) target = $region44
        $region43: #{tpu_custom_call.1} parent=39 // pred_region
          %s1043 = smul.u32 16, %s29
          %s1045 = ssub.s32 2048, 2048
          %1046 = vsyncadd %s1031, %s1045
          %s1047 = smul.addr %s28, 16
          %s1048 = sadd.s32 %s1043, %s1047
          %s1049 = smul.addr %s1048, 128
          %s1050 = scalar_lea.hbm %s5, %s1049
          %s1051 = sshll.u32 %s1034, 4
          %s1052 = int_to_ptr.vmem [resolvable:$true] %s1051
          %1057 = dma.vmem_to_hbm [thread:$0]  %s1052, 2048, %s1050, %s1031, 128, 128, 8
        $region44: #{tpu_custom_call.1} parent=39 // pred_fallthru
          _
        // Predicated region
        $region45: #{tpu_custom_call.1} parent=39 // pred_check
          %p1058 = pneg %p213
        $region46: #{tpu_custom_call.1} parent=39 // pred_check_branch
          %1060 = sbr.rel (%p1058) target = $region48
        $region47: #{tpu_custom_call.1} parent=39 // pred_region
          %s1061 = smul.u32 16, %s29
          %s1063 = ssub.s32 2048, 2048
          %1064 = vsyncadd %s1036, %s1063
          %s1065 = smul.addr %s28, 16
          %s1066 = sadd.s32 %s1061, %s1065
          %s1067 = smul.addr %s1066, 128
          %s1068 = scalar_lea.hbm %s6, %s1067
          %s1069 = sshll.u32 %s1039, 4
          %s1070 = int_to_ptr.vmem [resolvable:$true] %s1069
          %1075 = dma.vmem_to_hbm [thread:$0]  %s1070, 2048, %s1068, %s1036, 128, 128, 8
        $region48: #{tpu_custom_call.1} parent=39 // pred_fallthru
          _
      $region40: #{tpu_custom_call.1} parent=5 // pred_fallthru
        _
      %p1076 = scmp.le.s32.totalorder 2, %s19
      // Predicated region
      $region49: #{tpu_custom_call.1} parent=5 // pred_check
        %p1077 = pneg %p1076
      $region50: #{tpu_custom_call.1} parent=5 // pred_check_branch
        %1079 = sbr.rel (%p1077) target = $region52
      $region51: #{tpu_custom_call.1} parent=5 // pred_region
        %s1080 = ssub.s32 %s19, 2
        // Predicated region
        $region53: #{tpu_custom_call.1} parent=51 // pred_check
          %p1081 = pneg %p191
        $region54: #{tpu_custom_call.1} parent=51 // pred_check_branch
          %1083 = sbr.rel (%p1081) target = $region56
        $region55: #{tpu_custom_call.1} parent=51 // pred_region
          %s1084 = sand.u32 %s176, 1
          %s1085 = scalar_lea.sflag [#allocation3], %s1084
          %s1086 = sand.u32 %s176, 1
          %s1087 = smul.addr %s1086, 128
          %s1088 = scalar_lea.vmem [#allocation2], %s1087
          %1089 = dma.done %s1085, 2048
        $region56: #{tpu_custom_call.1} parent=51 // pred_fallthru
          _
        // Predicated region
        $region57: #{tpu_custom_call.1} parent=51 // pred_check
          %p1090 = pneg %p219
        $region58: #{tpu_custom_call.1} parent=51 // pred_check_branch
          %1092 = sbr.rel (%p1090) target = $region60
        $region59: #{tpu_custom_call.1} parent=51 // pred_region
          %s1093 = sand.u32 %s204, 1
          %s1094 = scalar_lea.sflag [#allocation5], %s1093
          %s1095 = sand.u32 %s204, 1
          %s1096 = smul.addr %s1095, 128
          %s1097 = scalar_lea.vmem [#allocation4], %s1096
          %1098 = dma.done %s1094, 2048
        $region60: #{tpu_custom_call.1} parent=51 // pred_fallthru
          _
      $region52: #{tpu_custom_call.1} parent=5 // pred_fallthru
        _
    $region6: #{tpu_custom_call.1} parent=1 // loop_footer
      %s23 = sadd.s32 1, %s19
    $region7: #{tpu_custom_call.1} parent=1 // loop_footer_branch
      %18 = sbr.rel target = $region3
    $region8: #{tpu_custom_call.1} parent=1 // loop_exit
      _
    %1099 = vsyncpa [#allocation3], 1
    %s1100 = scalar_lea.sflag [#allocation3], 1
    %1101 = vsyncpa %s1100, 1
    %1102 = vsyncpa [#allocation5], 1
    %s1103 = scalar_lea.sflag [#allocation5], 1
    %1104 = vsyncpa %s1103, 1

</llo_original>
